<compile_context>
chip_gen: v7x
topology: tpu7x:2x2x1
jax: 0.10.0
libtpu: 0.0.40
codegen_flags: <defaults>
</compile_context>

<pallas_src>
import functools
import math

import jax
import jax.numpy as jnp
from jax.experimental import pallas as pl
from jax.experimental.pallas import tpu as pltpu


_SMALL_K = 8  # contractions at or below this width run on the VPU, not the MXU
_SMALL_M = 8  # layers with at most this many outputs also stay on the VPU


def _round_up(n, m):
    return ((n + m - 1) // m) * m


def mlp_kernel(xT_ref, *refs, use_bf16=True):
    """Fused forward: (Linear -> tanh) * (L-1) -> Linear, feature-major layout.

    refs = (w0, b0, w1, b1, ..., w_last, b_last, out_ref)
      xT_ref : (in_dim, TB)   activations, batch on the lane axis
      w_i    : (out_i, in_i)  PyTorch nn.Linear weight layout
      b_i    : (out_i, 1)
      out_ref: (out_dim, TB)
    """
    out_ref = refs[-1]
    wb = refs[:-1]
    n_layers = len(wb) // 2

    h = xT_ref[...].astype(jnp.float32)                     # (features, TB)
    for i in range(n_layers):
        w = wb[2 * i][...]                                  # (out, in)
        b = wb[2 * i + 1][...].astype(jnp.float32)          # (out, 1)
        out_dim, k_dim = w.shape
        if k_dim <= _SMALL_K or out_dim <= _SMALL_M:
            # Tiny contraction (K=2 input layer) or tiny output (3-wide head):
            # broadcast multiply-adds on the VPU avoid padding to 128/256 rows
            # on the MXU and keep the MXU free for the hidden layers.
            # TODO(synk): a stride-0 sublane read (pl.ds(k, out, stride=0))
            # could fold the row broadcast into the vld for the input layer.
            w = w.astype(jnp.float32)
            acc = b                                         # lane-broadcast bias
            for k in range(k_dim):
                acc = acc + w[:, k:k + 1] * h[k:k + 1, :]
            h = acc                                         # (out, TB)
        else:
            if use_bf16:
                # bf16 operands, f32 accumulation: single-pass on the MXU.
                h = jnp.dot(w.astype(jnp.bfloat16), h.astype(jnp.bfloat16),
                            preferred_element_type=jnp.float32) + b
            else:
                h = jnp.dot(w.astype(jnp.float32), h,
                            preferred_element_type=jnp.float32) + b
        if i < n_layers - 1:                                # final Linear: no activation
            h = jnp.tanh(h)
    out_ref[...] = h.astype(out_ref.dtype)


def mlp_forward(x, params, *, block_batch=2048, use_bf16_matmul=True,
                x_feature_major=False, return_feature_major=False):
    """Forward pass of the PINN MLP.

    x: (B, in_dim) by default, or (in_dim, B) if x_feature_major=True.
    params: list of (W, b) with W: (out, in), b: (out, 1).
    Returns (B, out_dim), or (out_dim, B) if return_feature_major=True.
    """
    if x_feature_major:
        in_dim, B = x.shape
    else:
        B, in_dim = x.shape
    out_dim = params[-1][0].shape[0]

    # Lane-aligned batch tile. Cap at half the padded batch (>=128) so the
    # grid has >= 2 steps whenever possible -> v7x can shard over both TCs.
    B128 = _round_up(B, 128)
    tb_cap = max(128, B128 // 2)
    TB = _round_up(min(block_batch, tb_cap), 128)
    B_pad = _round_up(B, TB)

    # Feature-major input: (in_dim, B_pad), zero-padded batch columns.
    xT_src = x if x_feature_major else x.T
    if B_pad == B and x_feature_major:
        xT = x
    else:
        xT = jnp.zeros((in_dim, B_pad), x.dtype).at[:, :B].set(xT_src)

    flat = []
    in_specs = [pl.BlockSpec((in_dim, TB), lambda i: (0, i))]
    for w, b in params:
        flat.append(w)
        flat.append(b)
        # Full-array blocks, constant index map -> fetched once, VMEM-resident.
        in_specs.append(pl.BlockSpec(w.shape, lambda i: (0, 0)))
        in_specs.append(pl.BlockSpec(b.shape, lambda i: (0, 0)))

    kernel = functools.partial(mlp_kernel, use_bf16=use_bf16_matmul)

    outT = pl.pallas_call(
        kernel,
        out_shape=jax.ShapeDtypeStruct((out_dim, B_pad), x.dtype),
        grid=(B_pad // TB,),
        in_specs=in_specs,
        out_specs=pl.BlockSpec((out_dim, TB), lambda i: (0, i)),
        compiler_params=pltpu.CompilerParams(
            dimension_semantics=("parallel",),
        ),
    )(xT, *flat)

    outT = outT[:, :B]
    if return_feature_major:
        return outT
    return outT.T  # PyTorch-facing (B, out_dim) layout


def init_params(layers, key):
    """torch.nn.Linear default init: U(-1/sqrt(fan_in), 1/sqrt(fan_in)).

    W stored as (out, in) (PyTorch layout), b as (out, 1).
    """
    params = []
    for i in range(len(layers) - 1):
        fan_in, fan_out = layers[i], layers[i + 1]
        key, kw, kb = jax.random.split(key, 3)
        bound = 1.0 / math.sqrt(fan_in)
        w = jax.random.uniform(kw, (fan_out, fan_in), jnp.float32, -bound, bound)
        b = jax.random.uniform(kb, (fan_out, 1), jnp.float32, -bound, bound)
        params.append((w, b))
    return params


def reference_forward(x, params):
    """Pure-JAX reference of the PyTorch NN.forward."""
    h = x
    for i, (w, b) in enumerate(params):
        h = h @ w.T + b[:, 0]
        if i < len(params) - 1:
            h = jnp.tanh(h)
    return h


if __name__ == "__main__":
    # PINN-style layer spec: 2 inputs (e.g. x, t), hidden widths 32, 3 outputs.
    layers = [2, 32, 32, 32, 3]
    batch = 8

    key = jax.random.PRNGKey(0)
    key, kx = jax.random.split(key)
    x = jax.random.normal(kx, (batch, layers[0]), jnp.float32)
    params = init_params(layers, key)
    ref = reference_forward(x, params)

    # f32 MXU path: bit-for-bit-ish match against the reference.
    out_f32 = jax.block_until_ready(mlp_forward(x, params, use_bf16_matmul=False))
    assert out_f32.shape == (batch, layers[-1])
    assert jnp.allclose(out_f32, ref, atol=1e-5, rtol=1e-5), \
        "Pallas f32 output mismatch vs reference"

    # Default bf16 MXU path (f32 accumulation): relaxed tolerance for bf16
    # input rounding on the 32-wide hidden contractions.
    out_bf16 = jax.block_until_ready(mlp_forward(x, params))
    assert out_bf16.shape == (batch, layers[-1])
    assert jnp.allclose(out_bf16, ref, atol=5e-2, rtol=5e-2), \
        "Pallas bf16 output mismatch vs reference"

    # Feature-major I/O path (no wrapper-side transposes).
    out_fm = jax.block_until_ready(
        mlp_forward(x.T, params, x_feature_major=True, return_feature_major=True))
    assert out_fm.shape == (layers[-1], batch)
    assert jnp.allclose(out_fm.T, out_bf16, atol=1e-6, rtol=1e-6), \
        "Feature-major path mismatch"

    print("KERNEL_OK")
</pallas_src>

<mosaic_0001>
module attributes {stable_mosaic.version = 11 : i64} {
  func.func @mlp_kernel(%arg0: i32, %arg1: memref<2x128xf32, #tpu.memory_space<vmem>>, %arg2: memref<32x2xf32, #tpu.memory_space<vmem>>, %arg3: memref<32x1xf32, #tpu.memory_space<vmem>>, %arg4: memref<32x32xf32, #tpu.memory_space<vmem>>, %arg5: memref<32x1xf32, #tpu.memory_space<vmem>>, %arg6: memref<32x32xf32, #tpu.memory_space<vmem>>, %arg7: memref<32x1xf32, #tpu.memory_space<vmem>>, %arg8: memref<3x32xf32, #tpu.memory_space<vmem>>, %arg9: memref<3x1xf32, #tpu.memory_space<vmem>>, %arg10: memref<3x128xf32, #tpu.memory_space<vmem>>) attributes {dimension_semantics = [#tpu.dimension_semantics<parallel>], iteration_bounds = array<i64: 1>, scalar_prefetch = 0 : i64, scratch_operands = 0 : i64, tpu.core_type = #tpu.core_type<tc>, window_params = [{transform_indices = @transform_0, window_bounds = array<i64: 2, 128>}, {pipeline_mode = #tpu.pipeline_mode<synchronous>, transform_indices = @transform_1, window_bounds = array<i64: 32, 2>}, {pipeline_mode = #tpu.pipeline_mode<synchronous>, transform_indices = @transform_2, window_bounds = array<i64: 32, 1>}, {pipeline_mode = #tpu.pipeline_mode<synchronous>, transform_indices = @transform_3, window_bounds = array<i64: 32, 32>}, {pipeline_mode = #tpu.pipeline_mode<synchronous>, transform_indices = @transform_4, window_bounds = array<i64: 32, 1>}, {pipeline_mode = #tpu.pipeline_mode<synchronous>, transform_indices = @transform_5, window_bounds = array<i64: 32, 32>}, {pipeline_mode = #tpu.pipeline_mode<synchronous>, transform_indices = @transform_6, window_bounds = array<i64: 32, 1>}, {pipeline_mode = #tpu.pipeline_mode<synchronous>, transform_indices = @transform_7, window_bounds = array<i64: 3, 32>}, {pipeline_mode = #tpu.pipeline_mode<synchronous>, transform_indices = @transform_8, window_bounds = array<i64: 3, 1>}, {transform_indices = @transform_9, window_bounds = array<i64: 3, 128>}]} {
    %c0 = arith.constant 0 : index
    %c0_0 = arith.constant 0 : index
    %0 = vector.load %arg1[%c0, %c0_0] : memref<2x128xf32, #tpu.memory_space<vmem>>, vector<2x128xf32>
    %c0_1 = arith.constant 0 : index
    %c0_2 = arith.constant 0 : index
    %1 = vector.load %arg2[%c0_1, %c0_2] : memref<32x2xf32, #tpu.memory_space<vmem>>, vector<32x2xf32>
    %c0_3 = arith.constant 0 : index
    %c0_4 = arith.constant 0 : index
    %2 = vector.load %arg3[%c0_3, %c0_4] : memref<32x1xf32, #tpu.memory_space<vmem>>, vector<32x1xf32>
    %3 = vector.extract_strided_slice %1 {offsets = [0, 0], sizes = [32, 1], strides = [1, 1]} : vector<32x2xf32> to vector<32x1xf32>
    %4 = vector.extract_strided_slice %0 {offsets = [0, 0], sizes = [1, 128], strides = [1, 1]} : vector<2x128xf32> to vector<1x128xf32>
    %5 = vector.broadcast %3 : vector<32x1xf32> to vector<32x128xf32>
    %6 = vector.broadcast %4 : vector<1x128xf32> to vector<32x128xf32>
    %7 = arith.mulf %5, %6 : vector<32x128xf32>
    %8 = vector.broadcast %2 : vector<32x1xf32> to vector<32x128xf32>
    %9 = arith.addf %8, %7 : vector<32x128xf32>
    %10 = vector.extract_strided_slice %1 {offsets = [0, 1], sizes = [32, 1], strides = [1, 1]} : vector<32x2xf32> to vector<32x1xf32>
    %11 = vector.extract_strided_slice %0 {offsets = [1, 0], sizes = [1, 128], strides = [1, 1]} : vector<2x128xf32> to vector<1x128xf32>
    %12 = vector.broadcast %10 : vector<32x1xf32> to vector<32x128xf32>
    %13 = vector.broadcast %11 : vector<1x128xf32> to vector<32x128xf32>
    %14 = arith.mulf %12, %13 : vector<32x128xf32>
    %15 = arith.addf %9, %14 : vector<32x128xf32>
    %16 = math.tanh %15 : vector<32x128xf32>
    %c0_5 = arith.constant 0 : index
    %c0_6 = arith.constant 0 : index
    %17 = vector.load %arg4[%c0_5, %c0_6] : memref<32x32xf32, #tpu.memory_space<vmem>>, vector<32x32xf32>
    %c0_7 = arith.constant 0 : index
    %c0_8 = arith.constant 0 : index
    %18 = vector.load %arg5[%c0_7, %c0_8] : memref<32x1xf32, #tpu.memory_space<vmem>>, vector<32x1xf32>
    %cst = arith.constant dense<0.000000e+00> : vector<32x128xf32>
    %19 = tpu.matmul %17, %16, %cst {dimension_numbers = #tpu.dot_dimension_numbers<[1], [0], [0], [1], [0, 0, 1, 1], [], []>} : vector<32x32xf32>, vector<32x128xf32>, vector<32x128xf32> -> vector<32x128xf32>
    %20 = vector.broadcast %18 : vector<32x1xf32> to vector<32x128xf32>
    %21 = arith.addf %19, %20 : vector<32x128xf32>
    %22 = math.tanh %21 : vector<32x128xf32>
    %c0_9 = arith.constant 0 : index
    %c0_10 = arith.constant 0 : index
    %23 = vector.load %arg6[%c0_9, %c0_10] : memref<32x32xf32, #tpu.memory_space<vmem>>, vector<32x32xf32>
    %c0_11 = arith.constant 0 : index
    %c0_12 = arith.constant 0 : index
    %24 = vector.load %arg7[%c0_11, %c0_12] : memref<32x1xf32, #tpu.memory_space<vmem>>, vector<32x1xf32>
    %cst_13 = arith.constant dense<0.000000e+00> : vector<32x128xf32>
    %25 = tpu.matmul %23, %22, %cst_13 {dimension_numbers = #tpu.dot_dimension_numbers<[1], [0], [0], [1], [0, 0, 1, 1], [], []>} : vector<32x32xf32>, vector<32x128xf32>, vector<32x128xf32> -> vector<32x128xf32>
    %26 = vector.broadcast %24 : vector<32x1xf32> to vector<32x128xf32>
    %27 = arith.addf %25, %26 : vector<32x128xf32>
    %28 = math.tanh %27 : vector<32x128xf32>
    %c0_14 = arith.constant 0 : index
    %c0_15 = arith.constant 0 : index
    %29 = vector.load %arg8[%c0_14, %c0_15] : memref<3x32xf32, #tpu.memory_space<vmem>>, vector<3x32xf32>
    %c0_16 = arith.constant 0 : index
    %c0_17 = arith.constant 0 : index
    %30 = vector.load %arg9[%c0_16, %c0_17] : memref<3x1xf32, #tpu.memory_space<vmem>>, vector<3x1xf32>
    %31 = vector.extract_strided_slice %29 {offsets = [0, 0], sizes = [3, 1], strides = [1, 1]} : vector<3x32xf32> to vector<3x1xf32>
    %32 = vector.extract_strided_slice %28 {offsets = [0, 0], sizes = [1, 128], strides = [1, 1]} : vector<32x128xf32> to vector<1x128xf32>
    %33 = vector.broadcast %31 : vector<3x1xf32> to vector<3x128xf32>
    %34 = vector.broadcast %32 : vector<1x128xf32> to vector<3x128xf32>
    %35 = arith.mulf %33, %34 : vector<3x128xf32>
    %36 = vector.broadcast %30 : vector<3x1xf32> to vector<3x128xf32>
    %37 = arith.addf %36, %35 : vector<3x128xf32>
    %38 = vector.extract_strided_slice %29 {offsets = [0, 1], sizes = [3, 1], strides = [1, 1]} : vector<3x32xf32> to vector<3x1xf32>
    %39 = vector.extract_strided_slice %28 {offsets = [1, 0], sizes = [1, 128], strides = [1, 1]} : vector<32x128xf32> to vector<1x128xf32>
    %40 = vector.broadcast %38 : vector<3x1xf32> to vector<3x128xf32>
    %41 = vector.broadcast %39 : vector<1x128xf32> to vector<3x128xf32>
    %42 = arith.mulf %40, %41 : vector<3x128xf32>
    %43 = arith.addf %37, %42 : vector<3x128xf32>
    %44 = vector.extract_strided_slice %29 {offsets = [0, 2], sizes = [3, 1], strides = [1, 1]} : vector<3x32xf32> to vector<3x1xf32>
    %45 = vector.extract_strided_slice %28 {offsets = [2, 0], sizes = [1, 128], strides = [1, 1]} : vector<32x128xf32> to vector<1x128xf32>
    %46 = vector.broadcast %44 : vector<3x1xf32> to vector<3x128xf32>
    %47 = vector.broadcast %45 : vector<1x128xf32> to vector<3x128xf32>
    %48 = arith.mulf %46, %47 : vector<3x128xf32>
    %49 = arith.addf %43, %48 : vector<3x128xf32>
    %50 = vector.extract_strided_slice %29 {offsets = [0, 3], sizes = [3, 1], strides = [1, 1]} : vector<3x32xf32> to vector<3x1xf32>
    %51 = vector.extract_strided_slice %28 {offsets = [3, 0], sizes = [1, 128], strides = [1, 1]} : vector<32x128xf32> to vector<1x128xf32>
    %52 = vector.broadcast %50 : vector<3x1xf32> to vector<3x128xf32>
    %53 = vector.broadcast %51 : vector<1x128xf32> to vector<3x128xf32>
    %54 = arith.mulf %52, %53 : vector<3x128xf32>
    %55 = arith.addf %49, %54 : vector<3x128xf32>
    %56 = vector.extract_strided_slice %29 {offsets = [0, 4], sizes = [3, 1], strides = [1, 1]} : vector<3x32xf32> to vector<3x1xf32>
    %57 = vector.extract_strided_slice %28 {offsets = [4, 0], sizes = [1, 128], strides = [1, 1]} : vector<32x128xf32> to vector<1x128xf32>
    %58 = vector.broadcast %56 : vector<3x1xf32> to vector<3x128xf32>
    %59 = vector.broadcast %57 : vector<1x128xf32> to vector<3x128xf32>
    %60 = arith.mulf %58, %59 : vector<3x128xf32>
    %61 = arith.addf %55, %60 : vector<3x128xf32>
    %62 = vector.extract_strided_slice %29 {offsets = [0, 5], sizes = [3, 1], strides = [1, 1]} : vector<3x32xf32> to vector<3x1xf32>
    %63 = vector.extract_strided_slice %28 {offsets = [5, 0], sizes = [1, 128], strides = [1, 1]} : vector<32x128xf32> to vector<1x128xf32>
    %64 = vector.broadcast %62 : vector<3x1xf32> to vector<3x128xf32>
    %65 = vector.broadcast %63 : vector<1x128xf32> to vector<3x128xf32>
    %66 = arith.mulf %64, %65 : vector<3x128xf32>
    %67 = arith.addf %61, %66 : vector<3x128xf32>
    %68 = vector.extract_strided_slice %29 {offsets = [0, 6], sizes = [3, 1], strides = [1, 1]} : vector<3x32xf32> to vector<3x1xf32>
    %69 = vector.extract_strided_slice %28 {offsets = [6, 0], sizes = [1, 128], strides = [1, 1]} : vector<32x128xf32> to vector<1x128xf32>
    %70 = vector.broadcast %68 : vector<3x1xf32> to vector<3x128xf32>
    %71 = vector.broadcast %69 : vector<1x128xf32> to vector<3x128xf32>
    %72 = arith.mulf %70, %71 : vector<3x128xf32>
    %73 = arith.addf %67, %72 : vector<3x128xf32>
    %74 = vector.extract_strided_slice %29 {offsets = [0, 7], sizes = [3, 1], strides = [1, 1]} : vector<3x32xf32> to vector<3x1xf32>
    %75 = vector.extract_strided_slice %28 {offsets = [7, 0], sizes = [1, 128], strides = [1, 1]} : vector<32x128xf32> to vector<1x128xf32>
    %76 = vector.broadcast %74 : vector<3x1xf32> to vector<3x128xf32>
    %77 = vector.broadcast %75 : vector<1x128xf32> to vector<3x128xf32>
    %78 = arith.mulf %76, %77 : vector<3x128xf32>
    %79 = arith.addf %73, %78 : vector<3x128xf32>
    %80 = vector.extract_strided_slice %29 {offsets = [0, 8], sizes = [3, 1], strides = [1, 1]} : vector<3x32xf32> to vector<3x1xf32>
    %81 = vector.extract_strided_slice %28 {offsets = [8, 0], sizes = [1, 128], strides = [1, 1]} : vector<32x128xf32> to vector<1x128xf32>
    %82 = vector.broadcast %80 : vector<3x1xf32> to vector<3x128xf32>
    %83 = vector.broadcast %81 : vector<1x128xf32> to vector<3x128xf32>
    %84 = arith.mulf %82, %83 : vector<3x128xf32>
    %85 = arith.addf %79, %84 : vector<3x128xf32>
    %86 = vector.extract_strided_slice %29 {offsets = [0, 9], sizes = [3, 1], strides = [1, 1]} : vector<3x32xf32> to vector<3x1xf32>
    %87 = vector.extract_strided_slice %28 {offsets = [9, 0], sizes = [1, 128], strides = [1, 1]} : vector<32x128xf32> to vector<1x128xf32>
    %88 = vector.broadcast %86 : vector<3x1xf32> to vector<3x128xf32>
    %89 = vector.broadcast %87 : vector<1x128xf32> to vector<3x128xf32>
    %90 = arith.mulf %88, %89 : vector<3x128xf32>
    %91 = arith.addf %85, %90 : vector<3x128xf32>
    %92 = vector.extract_strided_slice %29 {offsets = [0, 10], sizes = [3, 1], strides = [1, 1]} : vector<3x32xf32> to vector<3x1xf32>
    %93 = vector.extract_strided_slice %28 {offsets = [10, 0], sizes = [1, 128], strides = [1, 1]} : vector<32x128xf32> to vector<1x128xf32>
    %94 = vector.broadcast %92 : vector<3x1xf32> to vector<3x128xf32>
    %95 = vector.broadcast %93 : vector<1x128xf32> to vector<3x128xf32>
    %96 = arith.mulf %94, %95 : vector<3x128xf32>
    %97 = arith.addf %91, %96 : vector<3x128xf32>
    %98 = vector.extract_strided_slice %29 {offsets = [0, 11], sizes = [3, 1], strides = [1, 1]} : vector<3x32xf32> to vector<3x1xf32>
    %99 = vector.extract_strided_slice %28 {offsets = [11, 0], sizes = [1, 128], strides = [1, 1]} : vector<32x128xf32> to vector<1x128xf32>
    %100 = vector.broadcast %98 : vector<3x1xf32> to vector<3x128xf32>
    %101 = vector.broadcast %99 : vector<1x128xf32> to vector<3x128xf32>
    %102 = arith.mulf %100, %101 : vector<3x128xf32>
    %103 = arith.addf %97, %102 : vector<3x128xf32>
    %104 = vector.extract_strided_slice %29 {offsets = [0, 12], sizes = [3, 1], strides = [1, 1]} : vector<3x32xf32> to vector<3x1xf32>
    %105 = vector.extract_strided_slice %28 {offsets = [12, 0], sizes = [1, 128], strides = [1, 1]} : vector<32x128xf32> to vector<1x128xf32>
    %106 = vector.broadcast %104 : vector<3x1xf32> to vector<3x128xf32>
    %107 = vector.broadcast %105 : vector<1x128xf32> to vector<3x128xf32>
    %108 = arith.mulf %106, %107 : vector<3x128xf32>
    %109 = arith.addf %103, %108 : vector<3x128xf32>
    %110 = vector.extract_strided_slice %29 {offsets = [0, 13], sizes = [3, 1], strides = [1, 1]} : vector<3x32xf32> to vector<3x1xf32>
    %111 = vector.extract_strided_slice %28 {offsets = [13, 0], sizes = [1, 128], strides = [1, 1]} : vector<32x128xf32> to vector<1x128xf32>
    %112 = vector.broadcast %110 : vector<3x1xf32> to vector<3x128xf32>
    %113 = vector.broadcast %111 : vector<1x128xf32> to vector<3x128xf32>
    %114 = arith.mulf %112, %113 : vector<3x128xf32>
    %115 = arith.addf %109, %114 : vector<3x128xf32>
    %116 = vector.extract_strided_slice %29 {offsets = [0, 14], sizes = [3, 1], strides = [1, 1]} : vector<3x32xf32> to vector<3x1xf32>
    %117 = vector.extract_strided_slice %28 {offsets = [14, 0], sizes = [1, 128], strides = [1, 1]} : vector<32x128xf32> to vector<1x128xf32>
    %118 = vector.broadcast %116 : vector<3x1xf32> to vector<3x128xf32>
    %119 = vector.broadcast %117 : vector<1x128xf32> to vector<3x128xf32>
    %120 = arith.mulf %118, %119 : vector<3x128xf32>
    %121 = arith.addf %115, %120 : vector<3x128xf32>
    %122 = vector.extract_strided_slice %29 {offsets = [0, 15], sizes = [3, 1], strides = [1, 1]} : vector<3x32xf32> to vector<3x1xf32>
    %123 = vector.extract_strided_slice %28 {offsets = [15, 0], sizes = [1, 128], strides = [1, 1]} : vector<32x128xf32> to vector<1x128xf32>
    %124 = vector.broadcast %122 : vector<3x1xf32> to vector<3x128xf32>
    %125 = vector.broadcast %123 : vector<1x128xf32> to vector<3x128xf32>
    %126 = arith.mulf %124, %125 : vector<3x128xf32>
    %127 = arith.addf %121, %126 : vector<3x128xf32>
    %128 = vector.extract_strided_slice %29 {offsets = [0, 16], sizes = [3, 1], strides = [1, 1]} : vector<3x32xf32> to vector<3x1xf32>
    %129 = vector.extract_strided_slice %28 {offsets = [16, 0], sizes = [1, 128], strides = [1, 1]} : vector<32x128xf32> to vector<1x128xf32>
    %130 = vector.broadcast %128 : vector<3x1xf32> to vector<3x128xf32>
    %131 = vector.broadcast %129 : vector<1x128xf32> to vector<3x128xf32>
    %132 = arith.mulf %130, %131 : vector<3x128xf32>
    %133 = arith.addf %127, %132 : vector<3x128xf32>
    %134 = vector.extract_strided_slice %29 {offsets = [0, 17], sizes = [3, 1], strides = [1, 1]} : vector<3x32xf32> to vector<3x1xf32>
    %135 = vector.extract_strided_slice %28 {offsets = [17, 0], sizes = [1, 128], strides = [1, 1]} : vector<32x128xf32> to vector<1x128xf32>
    %136 = vector.broadcast %134 : vector<3x1xf32> to vector<3x128xf32>
    %137 = vector.broadcast %135 : vector<1x128xf32> to vector<3x128xf32>
    %138 = arith.mulf %136, %137 : vector<3x128xf32>
    %139 = arith.addf %133, %138 : vector<3x128xf32>
    %140 = vector.extract_strided_slice %29 {offsets = [0, 18], sizes = [3, 1], strides = [1, 1]} : vector<3x32xf32> to vector<3x1xf32>
    %141 = vector.extract_strided_slice %28 {offsets = [18, 0], sizes = [1, 128], strides = [1, 1]} : vector<32x128xf32> to vector<1x128xf32>
    %142 = vector.broadcast %140 : vector<3x1xf32> to vector<3x128xf32>
    %143 = vector.broadcast %141 : vector<1x128xf32> to vector<3x128xf32>
    %144 = arith.mulf %142, %143 : vector<3x128xf32>
    %145 = arith.addf %139, %144 : vector<3x128xf32>
    %146 = vector.extract_strided_slice %29 {offsets = [0, 19], sizes = [3, 1], strides = [1, 1]} : vector<3x32xf32> to vector<3x1xf32>
    %147 = vector.extract_strided_slice %28 {offsets = [19, 0], sizes = [1, 128], strides = [1, 1]} : vector<32x128xf32> to vector<1x128xf32>
    %148 = vector.broadcast %146 : vector<3x1xf32> to vector<3x128xf32>
    %149 = vector.broadcast %147 : vector<1x128xf32> to vector<3x128xf32>
    %150 = arith.mulf %148, %149 : vector<3x128xf32>
    %151 = arith.addf %145, %150 : vector<3x128xf32>
    %152 = vector.extract_strided_slice %29 {offsets = [0, 20], sizes = [3, 1], strides = [1, 1]} : vector<3x32xf32> to vector<3x1xf32>
    %153 = vector.extract_strided_slice %28 {offsets = [20, 0], sizes = [1, 128], strides = [1, 1]} : vector<32x128xf32> to vector<1x128xf32>
    %154 = vector.broadcast %152 : vector<3x1xf32> to vector<3x128xf32>
    %155 = vector.broadcast %153 : vector<1x128xf32> to vector<3x128xf32>
    %156 = arith.mulf %154, %155 : vector<3x128xf32>
    %157 = arith.addf %151, %156 : vector<3x128xf32>
    %158 = vector.extract_strided_slice %29 {offsets = [0, 21], sizes = [3, 1], strides = [1, 1]} : vector<3x32xf32> to vector<3x1xf32>
    %159 = vector.extract_strided_slice %28 {offsets = [21, 0], sizes = [1, 128], strides = [1, 1]} : vector<32x128xf32> to vector<1x128xf32>
    %160 = vector.broadcast %158 : vector<3x1xf32> to vector<3x128xf32>
    %161 = vector.broadcast %159 : vector<1x128xf32> to vector<3x128xf32>
    %162 = arith.mulf %160, %161 : vector<3x128xf32>
    %163 = arith.addf %157, %162 : vector<3x128xf32>
    %164 = vector.extract_strided_slice %29 {offsets = [0, 22], sizes = [3, 1], strides = [1, 1]} : vector<3x32xf32> to vector<3x1xf32>
    %165 = vector.extract_strided_slice %28 {offsets = [22, 0], sizes = [1, 128], strides = [1, 1]} : vector<32x128xf32> to vector<1x128xf32>
    %166 = vector.broadcast %164 : vector<3x1xf32> to vector<3x128xf32>
    %167 = vector.broadcast %165 : vector<1x128xf32> to vector<3x128xf32>
    %168 = arith.mulf %166, %167 : vector<3x128xf32>
    %169 = arith.addf %163, %168 : vector<3x128xf32>
    %170 = vector.extract_strided_slice %29 {offsets = [0, 23], sizes = [3, 1], strides = [1, 1]} : vector<3x32xf32> to vector<3x1xf32>
    %171 = vector.extract_strided_slice %28 {offsets = [23, 0], sizes = [1, 128], strides = [1, 1]} : vector<32x128xf32> to vector<1x128xf32>
    %172 = vector.broadcast %170 : vector<3x1xf32> to vector<3x128xf32>
    %173 = vector.broadcast %171 : vector<1x128xf32> to vector<3x128xf32>
    %174 = arith.mulf %172, %173 : vector<3x128xf32>
    %175 = arith.addf %169, %174 : vector<3x128xf32>
    %176 = vector.extract_strided_slice %29 {offsets = [0, 24], sizes = [3, 1], strides = [1, 1]} : vector<3x32xf32> to vector<3x1xf32>
    %177 = vector.extract_strided_slice %28 {offsets = [24, 0], sizes = [1, 128], strides = [1, 1]} : vector<32x128xf32> to vector<1x128xf32>
    %178 = vector.broadcast %176 : vector<3x1xf32> to vector<3x128xf32>
    %179 = vector.broadcast %177 : vector<1x128xf32> to vector<3x128xf32>
    %180 = arith.mulf %178, %179 : vector<3x128xf32>
    %181 = arith.addf %175, %180 : vector<3x128xf32>
    %182 = vector.extract_strided_slice %29 {offsets = [0, 25], sizes = [3, 1], strides = [1, 1]} : vector<3x32xf32> to vector<3x1xf32>
    %183 = vector.extract_strided_slice %28 {offsets = [25, 0], sizes = [1, 128], strides = [1, 1]} : vector<32x128xf32> to vector<1x128xf32>
    %184 = vector.broadcast %182 : vector<3x1xf32> to vector<3x128xf32>
    %185 = vector.broadcast %183 : vector<1x128xf32> to vector<3x128xf32>
    %186 = arith.mulf %184, %185 : vector<3x128xf32>
    %187 = arith.addf %181, %186 : vector<3x128xf32>
    %188 = vector.extract_strided_slice %29 {offsets = [0, 26], sizes = [3, 1], strides = [1, 1]} : vector<3x32xf32> to vector<3x1xf32>
    %189 = vector.extract_strided_slice %28 {offsets = [26, 0], sizes = [1, 128], strides = [1, 1]} : vector<32x128xf32> to vector<1x128xf32>
    %190 = vector.broadcast %188 : vector<3x1xf32> to vector<3x128xf32>
    %191 = vector.broadcast %189 : vector<1x128xf32> to vector<3x128xf32>
    %192 = arith.mulf %190, %191 : vector<3x128xf32>
    %193 = arith.addf %187, %192 : vector<3x128xf32>
    %194 = vector.extract_strided_slice %29 {offsets = [0, 27], sizes = [3, 1], strides = [1, 1]} : vector<3x32xf32> to vector<3x1xf32>
    %195 = vector.extract_strided_slice %28 {offsets = [27, 0], sizes = [1, 128], strides = [1, 1]} : vector<32x128xf32> to vector<1x128xf32>
    %196 = vector.broadcast %194 : vector<3x1xf32> to vector<3x128xf32>
    %197 = vector.broadcast %195 : vector<1x128xf32> to vector<3x128xf32>
    %198 = arith.mulf %196, %197 : vector<3x128xf32>
    %199 = arith.addf %193, %198 : vector<3x128xf32>
    %200 = vector.extract_strided_slice %29 {offsets = [0, 28], sizes = [3, 1], strides = [1, 1]} : vector<3x32xf32> to vector<3x1xf32>
    %201 = vector.extract_strided_slice %28 {offsets = [28, 0], sizes = [1, 128], strides = [1, 1]} : vector<32x128xf32> to vector<1x128xf32>
    %202 = vector.broadcast %200 : vector<3x1xf32> to vector<3x128xf32>
    %203 = vector.broadcast %201 : vector<1x128xf32> to vector<3x128xf32>
    %204 = arith.mulf %202, %203 : vector<3x128xf32>
    %205 = arith.addf %199, %204 : vector<3x128xf32>
    %206 = vector.extract_strided_slice %29 {offsets = [0, 29], sizes = [3, 1], strides = [1, 1]} : vector<3x32xf32> to vector<3x1xf32>
    %207 = vector.extract_strided_slice %28 {offsets = [29, 0], sizes = [1, 128], strides = [1, 1]} : vector<32x128xf32> to vector<1x128xf32>
    %208 = vector.broadcast %206 : vector<3x1xf32> to vector<3x128xf32>
    %209 = vector.broadcast %207 : vector<1x128xf32> to vector<3x128xf32>
    %210 = arith.mulf %208, %209 : vector<3x128xf32>
    %211 = arith.addf %205, %210 : vector<3x128xf32>
    %212 = vector.extract_strided_slice %29 {offsets = [0, 30], sizes = [3, 1], strides = [1, 1]} : vector<3x32xf32> to vector<3x1xf32>
    %213 = vector.extract_strided_slice %28 {offsets = [30, 0], sizes = [1, 128], strides = [1, 1]} : vector<32x128xf32> to vector<1x128xf32>
    %214 = vector.broadcast %212 : vector<3x1xf32> to vector<3x128xf32>
    %215 = vector.broadcast %213 : vector<1x128xf32> to vector<3x128xf32>
    %216 = arith.mulf %214, %215 : vector<3x128xf32>
    %217 = arith.addf %211, %216 : vector<3x128xf32>
    %218 = vector.extract_strided_slice %29 {offsets = [0, 31], sizes = [3, 1], strides = [1, 1]} : vector<3x32xf32> to vector<3x1xf32>
    %219 = vector.extract_strided_slice %28 {offsets = [31, 0], sizes = [1, 128], strides = [1, 1]} : vector<32x128xf32> to vector<1x128xf32>
    %220 = vector.broadcast %218 : vector<3x1xf32> to vector<3x128xf32>
    %221 = vector.broadcast %219 : vector<1x128xf32> to vector<3x128xf32>
    %222 = arith.mulf %220, %221 : vector<3x128xf32>
    %223 = arith.addf %217, %222 : vector<3x128xf32>
    %c0_18 = arith.constant 0 : index
    %c0_19 = arith.constant 0 : index
    %224 = vector.load %arg10[%c0_18, %c0_19] : memref<3x128xf32, #tpu.memory_space<vmem>>, vector<3x128xf32>
    tpu.vector_store %arg10[%c0_18, %c0_19], %223 {strides = array<i32>} : memref<3x128xf32, #tpu.memory_space<vmem>>, vector<3x128xf32>,
    return
  }
  func.func @transform_0(%arg0: i32) -> (i32, i32) {
    %c0_i32 = arith.constant 0 : i32
    %c0_i32_0 = arith.constant 0 : i32
    return %c0_i32, %arg0 : i32, i32
  }
  func.func @transform_1(%arg0: i32) -> (i32, i32) {
    %c0_i32 = arith.constant 0 : i32
    %c0_i32_0 = arith.constant 0 : i32
    %c0_i32_1 = arith.constant 0 : i32
    return %c0_i32, %c0_i32_0 : i32, i32
  }
  func.func @transform_2(%arg0: i32) -> (i32, i32) {
    %c0_i32 = arith.constant 0 : i32
    %c0_i32_0 = arith.constant 0 : i32
    %c0_i32_1 = arith.constant 0 : i32
    return %c0_i32, %c0_i32_0 : i32, i32
  }
  func.func @transform_3(%arg0: i32) -> (i32, i32) {
    %c0_i32 = arith.constant 0 : i32
    %c0_i32_0 = arith.constant 0 : i32
    %c0_i32_1 = arith.constant 0 : i32
    return %c0_i32, %c0_i32_0 : i32, i32
  }
  func.func @transform_4(%arg0: i32) -> (i32, i32) {
    %c0_i32 = arith.constant 0 : i32
    %c0_i32_0 = arith.constant 0 : i32
    %c0_i32_1 = arith.constant 0 : i32
    return %c0_i32, %c0_i32_0 : i32, i32
  }
  func.func @transform_5(%arg0: i32) -> (i32, i32) {
    %c0_i32 = arith.constant 0 : i32
    %c0_i32_0 = arith.constant 0 : i32
    %c0_i32_1 = arith.constant 0 : i32
    return %c0_i32, %c0_i32_0 : i32, i32
  }
  func.func @transform_6(%arg0: i32) -> (i32, i32) {
    %c0_i32 = arith.constant 0 : i32
    %c0_i32_0 = arith.constant 0 : i32
    %c0_i32_1 = arith.constant 0 : i32
    return %c0_i32, %c0_i32_0 : i32, i32
  }
  func.func @transform_7(%arg0: i32) -> (i32, i32) {
    %c0_i32 = arith.constant 0 : i32
    %c0_i32_0 = arith.constant 0 : i32
    %c0_i32_1 = arith.constant 0 : i32
    return %c0_i32, %c0_i32_0 : i32, i32
  }
  func.func @transform_8(%arg0: i32) -> (i32, i32) {
    %c0_i32 = arith.constant 0 : i32
    %c0_i32_0 = arith.constant 0 : i32
    %c0_i32_1 = arith.constant 0 : i32
    return %c0_i32, %c0_i32_0 : i32, i32
  }
  func.func @transform_9(%arg0: i32) -> (i32, i32) {
    %c0_i32 = arith.constant 0 : i32
    %c0_i32_0 = arith.constant 0 : i32
    return %c0_i32, %arg0 : i32, i32
  }
}

</mosaic_0001>

<llo_original>
// kernel: tpu_custom_call.1
$region0: #{tpu_custom_call.1}
  #allocation0 [shape = 'u32[]', space=smem, size = 0x4, offset = 0x4, fixed_abs, tag = 'smem constant byte address 0x4 - core index']
  #allocation1 [shape = 'u32[144,128]{1,0:T(1,128)}', space=vmem, size = 0x12000, scoped, tag = 'internal scratch']
  %s0 = inlined_call_operand.vmem [shape: f32[2,128], index: 0, kind: input, shape index: {}]
  %s1 = inlined_call_operand.vmem [shape: f32[32,2], index: 1, kind: input, shape index: {}]
  %s2 = inlined_call_operand.vmem [shape: f32[32,1], index: 2, kind: input, shape index: {}]
  %s3 = inlined_call_operand.vmem [shape: f32[32,32], index: 3, kind: input, shape index: {}]
  %s4 = inlined_call_operand.vmem [shape: f32[32,1], index: 4, kind: input, shape index: {}]
  %s5 = inlined_call_operand.vmem [shape: f32[32,32], index: 5, kind: input, shape index: {}]
  %s6 = inlined_call_operand.vmem [shape: f32[32,1], index: 6, kind: input, shape index: {}]
  %s7 = inlined_call_operand.vmem [shape: f32[3,32], index: 7, kind: input, shape index: {}]
  %s8 = inlined_call_operand.vmem [shape: f32[3,1], index: 8, kind: input, shape index: {}]
  %s9 = inlined_call_operand.hbm [shape: f32[3,128], index: 9, kind: output, shape index: {}]
  %s10 = sld [smem:[#allocation0]]
  $region46: #{tpu_custom_call.1} parent=0
    _
  %s12 = ssub.s32 1, %s10
  %s13 = scalar_select 0, %s12, %s10
  $region1: #{tpu_custom_call.1} parent=0
    #allocation2 [shape = 'u8[2048]{0}', space=vmem, size = 0x800, scoped, tag = 'output window, operand 0, single buffered']
    #allocation3 [shape = 's32[1]{0}', space=sflag, size = 0x4, scoped, tag = 'scoped memory for tpu_custom_call.1']
    %14 = vsyncpa [#allocation3], 0
    // Predicated region
    $region2: #{tpu_custom_call.1} parent=1 // pred_check
      _
    $region3: #{tpu_custom_call.1} parent=1 // pred_check_branch
      %16 = sbr.rel (0) target = $region5
    $region4: #{tpu_custom_call.1} parent=1 // pred_region
      _
    $region5: #{tpu_custom_call.1} parent=1 // pred_fallthru
      _
    // Predicated region
    $region6: #{tpu_custom_call.1} parent=1 // pred_check
      _
    $region7: #{tpu_custom_call.1} parent=1 // pred_check_branch
      %18 = sbr.rel (0) target = $region9
    $region8: #{tpu_custom_call.1} parent=1 // pred_region
      _
    $region9: #{tpu_custom_call.1} parent=1 // pred_fallthru
      _
    // Predicated region
    $region10: #{tpu_custom_call.1} parent=1 // pred_check
      _
    $region11: #{tpu_custom_call.1} parent=1 // pred_check_branch
      %20 = sbr.rel (0) target = $region13
    $region12: #{tpu_custom_call.1} parent=1 // pred_region
      _
    $region13: #{tpu_custom_call.1} parent=1 // pred_fallthru
      _
    // Predicated region
    $region14: #{tpu_custom_call.1} parent=1 // pred_check
      _
    $region15: #{tpu_custom_call.1} parent=1 // pred_check_branch
      %22 = sbr.rel (0) target = $region17
    $region16: #{tpu_custom_call.1} parent=1 // pred_region
      _
    $region17: #{tpu_custom_call.1} parent=1 // pred_fallthru
      _
    // Predicated region
    $region18: #{tpu_custom_call.1} parent=1 // pred_check
      _
    $region19: #{tpu_custom_call.1} parent=1 // pred_check_branch
      %24 = sbr.rel (0) target = $region21
    $region20: #{tpu_custom_call.1} parent=1 // pred_region
      _
    $region21: #{tpu_custom_call.1} parent=1 // pred_fallthru
      _
    // Predicated region
    $region22: #{tpu_custom_call.1} parent=1 // pred_check
      _
    $region23: #{tpu_custom_call.1} parent=1 // pred_check_branch
      %26 = sbr.rel (0) target = $region25
    $region24: #{tpu_custom_call.1} parent=1 // pred_region
      _
    $region25: #{tpu_custom_call.1} parent=1 // pred_fallthru
      _
    // Predicated region
    $region26: #{tpu_custom_call.1} parent=1 // pred_check
      _
    $region27: #{tpu_custom_call.1} parent=1 // pred_check_branch
      %28 = sbr.rel (0) target = $region29
    $region28: #{tpu_custom_call.1} parent=1 // pred_region
      _
    $region29: #{tpu_custom_call.1} parent=1 // pred_fallthru
      _
    // Predicated region
    $region30: #{tpu_custom_call.1} parent=1 // pred_check
      _
    $region31: #{tpu_custom_call.1} parent=1 // pred_check_branch
      %30 = sbr.rel (0) target = $region33
    $region32: #{tpu_custom_call.1} parent=1 // pred_region
      _
    $region33: #{tpu_custom_call.1} parent=1 // pred_fallthru
      _
    // Predicated region
    $region34: #{tpu_custom_call.1} parent=1 // pred_check
      _
    $region35: #{tpu_custom_call.1} parent=1 // pred_check_branch
      %32 = sbr.rel (0) target = $region37
    $region36: #{tpu_custom_call.1} parent=1 // pred_region
      _
    $region37: #{tpu_custom_call.1} parent=1 // pred_fallthru
      _
    %v33 = vld [vmem:[%s0] sm:$0x3]
    %v34 = vld [vmem:[%s1] sm:$0xff]
    %v35 = vld [vmem:[%s1 + $0x8] sm:$0xff]
    %v36 = vld [vmem:[%s1 + $0x10] sm:$0xff]
    %v37 = vld [vmem:[%s1 + $0x18] sm:$0xff]
    %v38 = vld [vmem:[%s2] sm:$0xff]
    %v39 = vld [vmem:[%s2 + $0x8] sm:$0xff]
    %v40 = vld [vmem:[%s2 + $0x10] sm:$0xff]
    %v41 = vld [vmem:[%s2 + $0x18] sm:$0xff]
    %43 = vset.pattern.permute.xlu0 0
    %44 = vperm.xlu0 %43, %v34
    %v45 = vpop.permute.xlu0 %44
    %48 = vset.pattern.permute.xlu0 0
    %49 = vperm.xlu0 %48, %v35
    %v50 = vpop.permute.xlu0 %49
    %53 = vset.pattern.permute.xlu0 0
    %54 = vperm.xlu0 %53, %v36
    %v55 = vpop.permute.xlu0 %54
    %58 = vset.pattern.permute.xlu0 0
    %59 = vperm.xlu0 %58, %v37
    %v60 = vpop.permute.xlu0 %59
    %v62 = vlaneseq
    %v63 = vshrl.u32 %v62, 7
    %v64 = vsub.s32 0, %v63
    %v65 = vrot.slane %v33, %v64
    %v66 = vmul.f32 %v45, %v65
    %v67 = vmul.f32 %v50, %v65
    %v68 = vmul.f32 %v55, %v65
    %v69 = vmul.f32 %v60, %v65
    %71 = vset.pattern.permute.xlu0 0
    %72 = vperm.xlu0 %71, %v38
    %v73 = vpop.permute.xlu0 %72
    %76 = vset.pattern.permute.xlu0 0
    %77 = vperm.xlu0 %76, %v39
    %v78 = vpop.permute.xlu0 %77
    %81 = vset.pattern.permute.xlu0 0
    %82 = vperm.xlu0 %81, %v40
    %v83 = vpop.permute.xlu0 %82
    %86 = vset.pattern.permute.xlu0 0
    %87 = vperm.xlu0 %86, %v41
    %v88 = vpop.permute.xlu0 %87
    %v90 = vadd.f32 %v73, %v66
    %v91 = vadd.f32 %v78, %v67
    %v92 = vadd.f32 %v83, %v68
    %v93 = vadd.f32 %v88, %v69
    %94 = vset.pattern.permute.xlu0 1
    %95 = vperm.xlu0 %94, %v34
    %v96 = vpop.permute.xlu0 %95
    %98 = vset.pattern.permute.xlu0 1
    %99 = vperm.xlu0 %98, %v35
    %v100 = vpop.permute.xlu0 %99
    %102 = vset.pattern.permute.xlu0 1
    %103 = vperm.xlu0 %102, %v36
    %v104 = vpop.permute.xlu0 %103
    %106 = vset.pattern.permute.xlu0 1
    %107 = vperm.xlu0 %106, %v37
    %v108 = vpop.permute.xlu0 %107
    %v110 = vlaneseq
    %v111 = vshrl.u32 %v110, 7
    %v112 = vsub.s32 1, %v111
    %v113 = vrot.slane %v33, %v112
    %v114 = vmul.f32 %v96, %v113
    %v115 = vmul.f32 %v100, %v113
    %v116 = vmul.f32 %v104, %v113
    %v117 = vmul.f32 %v108, %v113
    %v118 = vadd.f32 %v90, %v114
    %v119 = vadd.f32 %v91, %v115
    %v120 = vadd.f32 %v92, %v116
    %v121 = vadd.f32 %v93, %v117
    %v122 = vtanh.pop %v118
    %v123 = vtanh.pop %v119
    %v124 = vtanh.pop %v120
    %v125 = vtanh.pop %v121
    %v126 = vld [vmem:[%s3] sm:$0xff]
    %v127 = vld [vmem:[%s3 + $0x8] sm:$0xff]
    %v128 = vld [vmem:[%s3 + $0x10] sm:$0xff]
    %v129 = vld [vmem:[%s3 + $0x18] sm:$0xff]
    %v130 = vld [vmem:[%s4] sm:$0xff]
    %v131 = vld [vmem:[%s4 + $0x8] sm:$0xff]
    %v132 = vld [vmem:[%s4 + $0x10] sm:$0xff]
    %v133 = vld [vmem:[%s4 + $0x18] sm:$0xff]
    %135 = vset.pattern.permute.xlu0 0
    %136 = vperm.xlu0 %135, %v130
    %v137 = vpop.permute.xlu0 %136
    %140 = vset.pattern.permute.xlu0 0
    %141 = vperm.xlu0 %140, %v131
    %v142 = vpop.permute.xlu0 %141
    %145 = vset.pattern.permute.xlu0 0
    %146 = vperm.xlu0 %145, %v132
    %v147 = vpop.permute.xlu0 %146
    %150 = vset.pattern.permute.xlu0 0
    %151 = vperm.xlu0 %150, %v133
    %v152 = vpop.permute.xlu0 %151
    %vm154 = vcmask 261120
    %v156 = vsel %vm154, %v126, 0
    %v159 = vsel %vm154, %v127, 0
    %v162 = vsel %vm154, %v128, 0
    %v165 = vsel %vm154, %v129, 0
    %167 = vmatprep.subr.mxu0 0.0
    %168 = vmatpush1.msra.mxu0 %v122
    %169 = vmatprep.subr.mxu0 0.0
    %170 = vmatpush1.msra.mxu0 %v123
    %171 = vmatprep.subr.mxu0 0.0
    %172 = vmatpush1.msra.mxu0 %v124
    %173 = vmatprep.subr.mxu0 0.0
    %174 = vmatpush1.msra.mxu0 %v125
    %175 = vmatprep.subr.mxu0 0.0
    %176 = vmatpush1.msra.mxu0 0.0
    %177 = vmatprep.subr.mxu0 0.0
    %178 = vmatpush1.msra.mxu0 0.0
    %179 = vmatprep.subr.mxu0 0.0
    %180 = vmatpush1.msra.mxu0 0.0
    %181 = vmatprep.subr.mxu0 0.0
    %182 = vmatpush1.msra.mxu0 0.0
    %183 = vmatprep.subr.mxu0 0.0
    %184 = vmatpush1.msra.mxu0 0.0
    %185 = vmatprep.subr.mxu0 0.0
    %186 = vmatpush1.msra.mxu0 0.0
    %187 = vmatprep.subr.mxu0 0.0
    %188 = vmatpush1.msra.mxu0 0.0
    %189 = vmatprep.subr.mxu0 0.0
    %190 = vmatpush1.msra.mxu0 0.0
    %191 = vmatprep.subr.mxu0 0.0
    %192 = vmatpush1.msra.mxu0 0.0
    %193 = vmatprep.subr.mxu0 0.0
    %194 = vmatpush1.msra.mxu0 0.0
    %195 = vmatprep.subr.mxu0 0.0
    %196 = vmatpush1.msra.mxu0 0.0
    %197 = vmatprep.subr.mxu0 0.0
    %198 = vmatpush1.msra.mxu0 0.0
    %199 = vmatprep.subr.mxu0 0.0
    %200 = vmatpush1.msra.mxu0 0.0
    %201 = vmatprep.subr.mxu0 0.0
    %202 = vmatpush1.msra.mxu0 0.0
    %203 = vmatprep.subr.mxu0 0.0
    %204 = vmatpush1.msra.mxu0 0.0
    %205 = vmatprep.subr.mxu0 0.0
    %206 = vmatpush1.msra.mxu0 0.0
    %207 = vmatprep.subr.mxu0 0.0
    %208 = vmatpush1.msra.mxu0 0.0
    %209 = vmatprep.subr.mxu0 0.0
    %210 = vmatpush1.msra.mxu0 0.0
    %211 = vmatprep.subr.mxu0 0.0
    %212 = vmatpush1.msra.mxu0 0.0
    %213 = vmatprep.subr.mxu0 0.0
    %214 = vmatpush1.msra.mxu0 0.0
    %215 = vmatprep.subr.mxu0 0.0
    %216 = vmatpush1.msra.mxu0 0.0
    %217 = vmatprep.subr.mxu0 0.0
    %218 = vmatpush1.msra.mxu0 0.0
    %219 = vmatprep.subr.mxu0 0.0
    %220 = vmatpush1.msra.mxu0 0.0
    %221 = vmatprep.subr.mxu0 0.0
    %222 = vmatpush1.msra.mxu0 0.0
    %223 = vmatprep.subr.mxu0 0.0
    %224 = vmatpush1.msra.mxu0 0.0
    %225 = vmatprep.subr.mxu0 0.0
    %226 = vmatpush1.msra.mxu0 0.0
    %227 = vmatprep.subr.mxu0 0.0
    %228 = vmatpush1.msra.mxu0 0.0
    %229 = vmatprep.subr.mxu0 0.0
    %230 = vmatpush1.msra.mxu0 0.0
    %231 = vmatprep.mubr.f32.mxu0 0.0
    %232 = vmatmul.mubr.f32.gmra.mrb[0].mxu0 %v156
    %v233 = vpop.f32.mrb[0].mxu0
    %v234 = vadd.f32 %v137, %v233
    %v235 = vpop.f32.mrb[0].mxu0
    %236 = vmatprep.mubr.f32.mxu0 0.0
    %237 = vmatmul.mubr.f32.gmra.mrb[0].mxu0 %v159
    %v238 = vpop.f32.mrb[0].mxu0
    %v239 = vadd.f32 %v142, %v238
    %v240 = vpop.f32.mrb[0].mxu0
    %241 = vmatprep.mubr.f32.mxu0 0.0
    %242 = vmatmul.mubr.f32.gmra.mrb[0].mxu0 %v162
    %v243 = vpop.f32.mrb[0].mxu0
    %v244 = vadd.f32 %v147, %v243
    %v245 = vpop.f32.mrb[0].mxu0
    %246 = vmatprep.mubr.f32.mxu0 0.0
    %247 = vmatmul.mubr.f32.gmra.mrb[0].mxu0 %v165
    %v248 = vpop.f32.mrb[0].mxu0
    %v249 = vadd.f32 %v152, %v248
    %v250 = vpop.f32.mrb[0].mxu0
    %251 = vdwg.mxu0
    %v252 = vtanh.pop %v234
    %v253 = vtanh.pop %v239
    %v254 = vtanh.pop %v244
    %v255 = vtanh.pop %v249
    %v256 = vld [vmem:[%s5] sm:$0xff]
    %v257 = vld [vmem:[%s5 + $0x8] sm:$0xff]
    %v258 = vld [vmem:[%s5 + $0x10] sm:$0xff]
    %v259 = vld [vmem:[%s5 + $0x18] sm:$0xff]
    %v260 = vld [vmem:[%s6] sm:$0xff]
    %v261 = vld [vmem:[%s6 + $0x8] sm:$0xff]
    %v262 = vld [vmem:[%s6 + $0x10] sm:$0xff]
    %v263 = vld [vmem:[%s6 + $0x18] sm:$0xff]
    %265 = vset.pattern.permute.xlu0 0
    %266 = vperm.xlu0 %265, %v260
    %v267 = vpop.permute.xlu0 %266
    %270 = vset.pattern.permute.xlu0 0
    %271 = vperm.xlu0 %270, %v261
    %v272 = vpop.permute.xlu0 %271
    %275 = vset.pattern.permute.xlu0 0
    %276 = vperm.xlu0 %275, %v262
    %v277 = vpop.permute.xlu0 %276
    %280 = vset.pattern.permute.xlu0 0
    %281 = vperm.xlu0 %280, %v263
    %v282 = vpop.permute.xlu0 %281
    %v285 = vsel %vm154, %v256, 0
    %v288 = vsel %vm154, %v257, 0
    %v291 = vsel %vm154, %v258, 0
    %v294 = vsel %vm154, %v259, 0
    %296 = vmatprep.subr.mxu0 0.0
    %297 = vmatpush1.msra.mxu0 %v252
    %298 = vmatprep.subr.mxu0 0.0
    %299 = vmatpush1.msra.mxu0 %v253
    %300 = vmatprep.subr.mxu0 0.0
    %301 = vmatpush1.msra.mxu0 %v254
    %302 = vmatprep.subr.mxu0 0.0
    %303 = vmatpush1.msra.mxu0 %v255
    %304 = vmatprep.subr.mxu0 0.0
    %305 = vmatpush1.msra.mxu0 0.0
    %306 = vmatprep.subr.mxu0 0.0
    %307 = vmatpush1.msra.mxu0 0.0
    %308 = vmatprep.subr.mxu0 0.0
    %309 = vmatpush1.msra.mxu0 0.0
    %310 = vmatprep.subr.mxu0 0.0
    %311 = vmatpush1.msra.mxu0 0.0
    %312 = vmatprep.subr.mxu0 0.0
    %313 = vmatpush1.msra.mxu0 0.0
    %314 = vmatprep.subr.mxu0 0.0
    %315 = vmatpush1.msra.mxu0 0.0
    %316 = vmatprep.subr.mxu0 0.0
    %317 = vmatpush1.msra.mxu0 0.0
    %318 = vmatprep.subr.mxu0 0.0
    %319 = vmatpush1.msra.mxu0 0.0
    %320 = vmatprep.subr.mxu0 0.0
    %321 = vmatpush1.msra.mxu0 0.0
    %322 = vmatprep.subr.mxu0 0.0
    %323 = vmatpush1.msra.mxu0 0.0
    %324 = vmatprep.subr.mxu0 0.0
    %325 = vmatpush1.msra.mxu0 0.0
    %326 = vmatprep.subr.mxu0 0.0
    %327 = vmatpush1.msra.mxu0 0.0
    %328 = vmatprep.subr.mxu0 0.0
    %329 = vmatpush1.msra.mxu0 0.0
    %330 = vmatprep.subr.mxu0 0.0
    %331 = vmatpush1.msra.mxu0 0.0
    %332 = vmatprep.subr.mxu0 0.0
    %333 = vmatpush1.msra.mxu0 0.0
    %334 = vmatprep.subr.mxu0 0.0
    %335 = vmatpush1.msra.mxu0 0.0
    %336 = vmatprep.subr.mxu0 0.0
    %337 = vmatpush1.msra.mxu0 0.0
    %338 = vmatprep.subr.mxu0 0.0
    %339 = vmatpush1.msra.mxu0 0.0
    %340 = vmatprep.subr.mxu0 0.0
    %341 = vmatpush1.msra.mxu0 0.0
    %342 = vmatprep.subr.mxu0 0.0
    %343 = vmatpush1.msra.mxu0 0.0
    %344 = vmatprep.subr.mxu0 0.0
    %345 = vmatpush1.msra.mxu0 0.0
    %346 = vmatprep.subr.mxu0 0.0
    %347 = vmatpush1.msra.mxu0 0.0
    %348 = vmatprep.subr.mxu0 0.0
    %349 = vmatpush1.msra.mxu0 0.0
    %350 = vmatprep.subr.mxu0 0.0
    %351 = vmatpush1.msra.mxu0 0.0
    %352 = vmatprep.subr.mxu0 0.0
    %353 = vmatpush1.msra.mxu0 0.0
    %354 = vmatprep.subr.mxu0 0.0
    %355 = vmatpush1.msra.mxu0 0.0
    %356 = vmatprep.subr.mxu0 0.0
    %357 = vmatpush1.msra.mxu0 0.0
    %358 = vmatprep.subr.mxu0 0.0
    %359 = vmatpush1.msra.mxu0 0.0
    %360 = vmatprep.mubr.f32.mxu0 0.0
    %361 = vmatmul.mubr.f32.gmra.mrb[0].mxu0 %v285
    %v362 = vpop.f32.mrb[0].mxu0
    %v363 = vadd.f32 %v267, %v362
    %v364 = vpop.f32.mrb[0].mxu0
    %365 = vmatprep.mubr.f32.mxu0 0.0
    %366 = vmatmul.mubr.f32.gmra.mrb[0].mxu0 %v288
    %v367 = vpop.f32.mrb[0].mxu0
    %v368 = vadd.f32 %v272, %v367
    %v369 = vpop.f32.mrb[0].mxu0
    %370 = vmatprep.mubr.f32.mxu0 0.0
    %371 = vmatmul.mubr.f32.gmra.mrb[0].mxu0 %v291
    %v372 = vpop.f32.mrb[0].mxu0
    %v373 = vadd.f32 %v277, %v372
    %v374 = vpop.f32.mrb[0].mxu0
    %375 = vmatprep.mubr.f32.mxu0 0.0
    %376 = vmatmul.mubr.f32.gmra.mrb[0].mxu0 %v294
    %v377 = vpop.f32.mrb[0].mxu0
    %v378 = vadd.f32 %v282, %v377
    %v379 = vpop.f32.mrb[0].mxu0
    %380 = vdwg.mxu0
    %v381 = vtanh.pop %v363
    %v382 = vtanh.pop %v368
    %v383 = vtanh.pop %v373
    %v384 = vtanh.pop %v378
    %v385 = vld [vmem:[%s7] sm:$0x7]
    %v386 = vld [vmem:[%s8] sm:$0x7]
    %388 = vset.pattern.permute.xlu0 0
    %389 = vperm.xlu0 %388, %v385
    %v390 = vpop.permute.xlu0 %389
    %v392 = vlaneseq
    %v393 = vshrl.u32 %v392, 7
    %v394 = vsub.s32 0, %v393
    %v395 = vrot.slane %v381, %v394
    %v396 = vmul.f32 %v390, %v395
    %398 = vset.pattern.permute.xlu0 0
    %399 = vperm.xlu0 %398, %v386
    %v400 = vpop.permute.xlu0 %399
    %v402 = vadd.f32 %v400, %v396
    %403 = vset.pattern.permute.xlu0 1
    %404 = vperm.xlu0 %403, %v385
    %v405 = vpop.permute.xlu0 %404
    %v407 = vlaneseq
    %v408 = vshrl.u32 %v407, 7
    %v409 = vsub.s32 1, %v408
    %v410 = vrot.slane %v381, %v409
    %v411 = vmul.f32 %v405, %v410
    %v412 = vadd.f32 %v402, %v411
    %413 = vset.pattern.permute.xlu0 2
    %414 = vperm.xlu0 %413, %v385
    %v415 = vpop.permute.xlu0 %414
    %v417 = vlaneseq
    %v418 = vshrl.u32 %v417, 7
    %v419 = vsub.s32 2, %v418
    %v420 = vrot.slane %v381, %v419
    %v421 = vmul.f32 %v415, %v420
    %v422 = vadd.f32 %v412, %v421
    %423 = vset.pattern.permute.xlu0 3
    %424 = vperm.xlu0 %423, %v385
    %v425 = vpop.permute.xlu0 %424
    %v427 = vlaneseq
    %v428 = vshrl.u32 %v427, 7
    %v429 = vsub.s32 3, %v428
    %v430 = vrot.slane %v381, %v429
    %v431 = vmul.f32 %v425, %v430
    %v432 = vadd.f32 %v422, %v431
    %433 = vset.pattern.permute.xlu0 4
    %434 = vperm.xlu0 %433, %v385
    %v435 = vpop.permute.xlu0 %434
    %v437 = vlaneseq
    %v438 = vshrl.u32 %v437, 7
    %v439 = vsub.s32 4, %v438
    %v440 = vrot.slane %v381, %v439
    %v441 = vmul.f32 %v435, %v440
    %v442 = vadd.f32 %v432, %v441
    %443 = vset.pattern.permute.xlu0 5
    %444 = vperm.xlu0 %443, %v385
    %v445 = vpop.permute.xlu0 %444
    %v447 = vlaneseq
    %v448 = vshrl.u32 %v447, 7
    %v449 = vsub.s32 5, %v448
    %v450 = vrot.slane %v381, %v449
    %v451 = vmul.f32 %v445, %v450
    %v452 = vadd.f32 %v442, %v451
    %453 = vset.pattern.permute.xlu0 6
    %454 = vperm.xlu0 %453, %v385
    %v455 = vpop.permute.xlu0 %454
    %v457 = vlaneseq
    %v458 = vshrl.u32 %v457, 7
    %v459 = vsub.s32 6, %v458
    %v460 = vrot.slane %v381, %v459
    %v461 = vmul.f32 %v455, %v460
    %v462 = vadd.f32 %v452, %v461
    %463 = vset.pattern.permute.xlu0 7
    %464 = vperm.xlu0 %463, %v385
    %v465 = vpop.permute.xlu0 %464
    %v467 = vlaneseq
    %v468 = vshrl.u32 %v467, 7
    %v469 = vsub.s32 7, %v468
    %v470 = vrot.slane %v381, %v469
    %v471 = vmul.f32 %v465, %v470
    %v472 = vadd.f32 %v462, %v471
    %473 = vset.pattern.permute.xlu0 8
    %474 = vperm.xlu0 %473, %v385
    %v475 = vpop.permute.xlu0 %474
    %v477 = vlaneseq
    %v478 = vshrl.u32 %v477, 7
    %v479 = vsub.s32 0, %v478
    %v480 = vrot.slane %v382, %v479
    %v481 = vmul.f32 %v475, %v480
    %v482 = vadd.f32 %v472, %v481
    %483 = vset.pattern.permute.xlu0 9
    %484 = vperm.xlu0 %483, %v385
    %v485 = vpop.permute.xlu0 %484
    %v487 = vlaneseq
    %v488 = vshrl.u32 %v487, 7
    %v489 = vsub.s32 1, %v488
    %v490 = vrot.slane %v382, %v489
    %v491 = vmul.f32 %v485, %v490
    %v492 = vadd.f32 %v482, %v491
    %493 = vset.pattern.permute.xlu0 10
    %494 = vperm.xlu0 %493, %v385
    %v495 = vpop.permute.xlu0 %494
    %v497 = vlaneseq
    %v498 = vshrl.u32 %v497, 7
    %v499 = vsub.s32 2, %v498
    %v500 = vrot.slane %v382, %v499
    %v501 = vmul.f32 %v495, %v500
    %v502 = vadd.f32 %v492, %v501
    %503 = vset.pattern.permute.xlu0 11
    %504 = vperm.xlu0 %503, %v385
    %v505 = vpop.permute.xlu0 %504
    %v507 = vlaneseq
    %v508 = vshrl.u32 %v507, 7
    %v509 = vsub.s32 3, %v508
    %v510 = vrot.slane %v382, %v509
    %v511 = vmul.f32 %v505, %v510
    %v512 = vadd.f32 %v502, %v511
    %513 = vset.pattern.permute.xlu0 12
    %514 = vperm.xlu0 %513, %v385
    %v515 = vpop.permute.xlu0 %514
    %v517 = vlaneseq
    %v518 = vshrl.u32 %v517, 7
    %v519 = vsub.s32 4, %v518
    %v520 = vrot.slane %v382, %v519
    %v521 = vmul.f32 %v515, %v520
    %v522 = vadd.f32 %v512, %v521
    %523 = vset.pattern.permute.xlu0 13
    %524 = vperm.xlu0 %523, %v385
    %v525 = vpop.permute.xlu0 %524
    %v527 = vlaneseq
    %v528 = vshrl.u32 %v527, 7
    %v529 = vsub.s32 5, %v528
    %v530 = vrot.slane %v382, %v529
    %v531 = vmul.f32 %v525, %v530
    %v532 = vadd.f32 %v522, %v531
    %533 = vset.pattern.permute.xlu0 14
    %534 = vperm.xlu0 %533, %v385
    %v535 = vpop.permute.xlu0 %534
    %v537 = vlaneseq
    %v538 = vshrl.u32 %v537, 7
    %v539 = vsub.s32 6, %v538
    %v540 = vrot.slane %v382, %v539
    %v541 = vmul.f32 %v535, %v540
    %v542 = vadd.f32 %v532, %v541
    %543 = vset.pattern.permute.xlu0 15
    %544 = vperm.xlu0 %543, %v385
    %v545 = vpop.permute.xlu0 %544
    %v547 = vlaneseq
    %v548 = vshrl.u32 %v547, 7
    %v549 = vsub.s32 7, %v548
    %v550 = vrot.slane %v382, %v549
    %v551 = vmul.f32 %v545, %v550
    %v552 = vadd.f32 %v542, %v551
    %553 = vset.pattern.permute.xlu0 16
    %554 = vperm.xlu0 %553, %v385
    %v555 = vpop.permute.xlu0 %554
    %v557 = vlaneseq
    %v558 = vshrl.u32 %v557, 7
    %v559 = vsub.s32 0, %v558
    %v560 = vrot.slane %v383, %v559
    %v561 = vmul.f32 %v555, %v560
    %v562 = vadd.f32 %v552, %v561
    %563 = vset.pattern.permute.xlu0 17
    %564 = vperm.xlu0 %563, %v385
    %v565 = vpop.permute.xlu0 %564
    %v567 = vlaneseq
    %v568 = vshrl.u32 %v567, 7
    %v569 = vsub.s32 1, %v568
    %v570 = vrot.slane %v383, %v569
    %v571 = vmul.f32 %v565, %v570
    %v572 = vadd.f32 %v562, %v571
    %573 = vset.pattern.permute.xlu0 18
    %574 = vperm.xlu0 %573, %v385
    %v575 = vpop.permute.xlu0 %574
    %v577 = vlaneseq
    %v578 = vshrl.u32 %v577, 7
    %v579 = vsub.s32 2, %v578
    %v580 = vrot.slane %v383, %v579
    %v581 = vmul.f32 %v575, %v580
    %v582 = vadd.f32 %v572, %v581
    %583 = vset.pattern.permute.xlu0 19
    %584 = vperm.xlu0 %583, %v385
    %v585 = vpop.permute.xlu0 %584
    %v587 = vlaneseq
    %v588 = vshrl.u32 %v587, 7
    %v589 = vsub.s32 3, %v588
    %v590 = vrot.slane %v383, %v589
    %v591 = vmul.f32 %v585, %v590
    %v592 = vadd.f32 %v582, %v591
    %593 = vset.pattern.permute.xlu0 20
    %594 = vperm.xlu0 %593, %v385
    %v595 = vpop.permute.xlu0 %594
    %v597 = vlaneseq
    %v598 = vshrl.u32 %v597, 7
    %v599 = vsub.s32 4, %v598
    %v600 = vrot.slane %v383, %v599
    %v601 = vmul.f32 %v595, %v600
    %v602 = vadd.f32 %v592, %v601
    %603 = vset.pattern.permute.xlu0 21
    %604 = vperm.xlu0 %603, %v385
    %v605 = vpop.permute.xlu0 %604
    %v607 = vlaneseq
    %v608 = vshrl.u32 %v607, 7
    %v609 = vsub.s32 5, %v608
    %v610 = vrot.slane %v383, %v609
    %v611 = vmul.f32 %v605, %v610
    %v612 = vadd.f32 %v602, %v611
    %613 = vset.pattern.permute.xlu0 22
    %614 = vperm.xlu0 %613, %v385
    %v615 = vpop.permute.xlu0 %614
    %v617 = vlaneseq
    %v618 = vshrl.u32 %v617, 7
    %v619 = vsub.s32 6, %v618
    %v620 = vrot.slane %v383, %v619
    %v621 = vmul.f32 %v615, %v620
    %v622 = vadd.f32 %v612, %v621
    %623 = vset.pattern.permute.xlu0 23
    %624 = vperm.xlu0 %623, %v385
    %v625 = vpop.permute.xlu0 %624
    %v627 = vlaneseq
    %v628 = vshrl.u32 %v627, 7
    %v629 = vsub.s32 7, %v628
    %v630 = vrot.slane %v383, %v629
    %v631 = vmul.f32 %v625, %v630
    %v632 = vadd.f32 %v622, %v631
    %633 = vset.pattern.permute.xlu0 24
    %634 = vperm.xlu0 %633, %v385
    %v635 = vpop.permute.xlu0 %634
    %v637 = vlaneseq
    %v638 = vshrl.u32 %v637, 7
    %v639 = vsub.s32 0, %v638
    %v640 = vrot.slane %v384, %v639
    %v641 = vmul.f32 %v635, %v640
    %v642 = vadd.f32 %v632, %v641
    %643 = vset.pattern.permute.xlu0 25
    %644 = vperm.xlu0 %643, %v385
    %v645 = vpop.permute.xlu0 %644
    %v647 = vlaneseq
    %v648 = vshrl.u32 %v647, 7
    %v649 = vsub.s32 1, %v648
    %v650 = vrot.slane %v384, %v649
    %v651 = vmul.f32 %v645, %v650
    %v652 = vadd.f32 %v642, %v651
    %653 = vset.pattern.permute.xlu0 26
    %654 = vperm.xlu0 %653, %v385
    %v655 = vpop.permute.xlu0 %654
    %v657 = vlaneseq
    %v658 = vshrl.u32 %v657, 7
    %v659 = vsub.s32 2, %v658
    %v660 = vrot.slane %v384, %v659
    %v661 = vmul.f32 %v655, %v660
    %v662 = vadd.f32 %v652, %v661
    %663 = vset.pattern.permute.xlu0 27
    %664 = vperm.xlu0 %663, %v385
    %v665 = vpop.permute.xlu0 %664
    %v667 = vlaneseq
    %v668 = vshrl.u32 %v667, 7
    %v669 = vsub.s32 3, %v668
    %v670 = vrot.slane %v384, %v669
    %v671 = vmul.f32 %v665, %v670
    %v672 = vadd.f32 %v662, %v671
    %673 = vset.pattern.permute.xlu0 28
    %674 = vperm.xlu0 %673, %v385
    %v675 = vpop.permute.xlu0 %674
    %v677 = vlaneseq
    %v678 = vshrl.u32 %v677, 7
    %v679 = vsub.s32 4, %v678
    %v680 = vrot.slane %v384, %v679
    %v681 = vmul.f32 %v675, %v680
    %v682 = vadd.f32 %v672, %v681
    %683 = vset.pattern.permute.xlu0 29
    %684 = vperm.xlu0 %683, %v385
    %v685 = vpop.permute.xlu0 %684
    %v687 = vlaneseq
    %v688 = vshrl.u32 %v687, 7
    %v689 = vsub.s32 5, %v688
    %v690 = vrot.slane %v384, %v689
    %v691 = vmul.f32 %v685, %v690
    %v692 = vadd.f32 %v682, %v691
    %693 = vset.pattern.permute.xlu0 30
    %694 = vperm.xlu0 %693, %v385
    %v695 = vpop.permute.xlu0 %694
    %v697 = vlaneseq
    %v698 = vshrl.u32 %v697, 7
    %v699 = vsub.s32 6, %v698
    %v700 = vrot.slane %v384, %v699
    %v701 = vmul.f32 %v695, %v700
    %v702 = vadd.f32 %v692, %v701
    %703 = vset.pattern.permute.xlu0 31
    %704 = vperm.xlu0 %703, %v385
    %v705 = vpop.permute.xlu0 %704
    %v707 = vlaneseq
    %v708 = vshrl.u32 %v707, 7
    %v709 = vsub.s32 7, %v708
    %v710 = vrot.slane %v384, %v709
    %v711 = vmul.f32 %v705, %v710
    %v712 = vadd.f32 %v702, %v711
    %713 = vst [vmem:[#allocation2] sm:$0x7] %v712
    // Predicated region
    $region38: #{tpu_custom_call.1} parent=1 // pred_check
      _
    $region39: #{tpu_custom_call.1} parent=1 // pred_check_branch
      %715 = sbr.rel (0) target = $region41
    $region40: #{tpu_custom_call.1} parent=1 // pred_region
      %s717 = ssub.s32 64, 64
      %718 = vsyncadd [#allocation3], %s717
      %s720 = sshll.u32 [#allocation2], 4
      %s721 = int_to_ptr.vmem [resolvable:$true] %s720
      %723 = dma.vmem_to_hbm [thread:$0]  %s721, 64, %s9, [#allocation3]
    $region41: #{tpu_custom_call.1} parent=1 // pred_fallthru
      _
    // Predicated region
    $region42: #{tpu_custom_call.1} parent=1 // pred_check
      _
    $region43: #{tpu_custom_call.1} parent=1 // pred_check_branch
      %725 = sbr.rel (0) target = $region45
    $region44: #{tpu_custom_call.1} parent=1 // pred_region
      %726 = dma.done [#allocation3], 64
    $region45: #{tpu_custom_call.1} parent=1 // pred_fallthru
      _
    %727 = vsyncpa [#allocation3], 1

</llo_original>
